<compile_context>
chip_gen: v5e
topology: v5e:2x2
jax: 0.10.0
libtpu: 0.0.40
codegen_flags: <defaults>
</compile_context>

<pallas_src>
import functools

import jax
import jax.numpy as jnp
from jax.experimental import pallas as pl
from jax.experimental.pallas import tpu as pltpu


def _attention_kernel(h_ref, q_ref, o_ref, m_sc, l_sc, acc_sc):
    """Online-softmax attention pooling for ONE batch row, one (ts, D) S-tile.

    Grid is (B, S // ts); S is the trailing ("arbitrary") reduction axis, so the
    running max / denominator / accumulator scratch persist across the S tiles of
    a row and are re-initialized when a new row starts (s_idx == 0).  All math is
    exact f32 on VPU/XLU (lane reduce for scores, sublane reduce for pooling).
    """
    s_idx = pl.program_id(1)

    @pl.when(s_idx == 0)
    def _():
        m_sc[...] = jnp.full(m_sc.shape, -jnp.inf, dtype=jnp.float32)
        l_sc[...] = jnp.zeros(l_sc.shape, dtype=jnp.float32)
        acc_sc[...] = jnp.zeros(acc_sc.shape, dtype=jnp.float32)

    h = h_ref[0].astype(jnp.float32)                       # (ts, D)
    q = q_ref[0].astype(jnp.float32)                       # (1, D)

    # Scores: VPU multiply + lane (last-axis) reduce.  Single query column ->
    # deliberately not an MXU matmul (avoids f32-on-MXU precision passes).
    scores = jnp.sum(h * q, axis=-1, keepdims=True)        # (ts, 1)

    m_prev = m_sc[...]                                     # (1, 1)
    m_new = jnp.maximum(m_prev, jnp.max(scores, axis=0, keepdims=True))
    alpha = jnp.exp(m_prev - m_new)                        # (1, 1)
    p = jnp.exp(scores - m_new)                            # (ts, 1)

    l_sc[...] = alpha * l_sc[...] + jnp.sum(p, axis=0, keepdims=True)
    acc_sc[...] = alpha * acc_sc[...] + jnp.sum(p * h, axis=0, keepdims=True)
    m_sc[...] = m_new

    # Unconditional write: the output block index depends only on the batch axis,
    # so the block stays resident across the S reduction and the value produced on
    # the final S step is what gets written back to HBM.  Exact division (no
    # approx reciprocal) -- it is (1, D)-sized, negligible.
    o_ref[0] = (acc_sc[...] / l_sc[...]).astype(o_ref.dtype)


def _vmem_limits():
    """(physical_vmem_bytes, vmem_limit_bytes) derived from the running chip."""
    try:
        phys = int(pltpu.get_tpu_info().vmem_capacity_bytes)
    except Exception:  # no TPU info available (e.g. interpret mode): assume v7x.
        phys = 64 << 20
    limit = max(32 << 20, min(phys * 3 // 4, 100 << 20))
    return phys, limit


def _choose_seq_tile(S, D, itemsize, budget_bytes):
    """Largest S tile whose per-step VMEM footprint fits the streaming budget."""

    def footprint(ts):
        # double-buffered h block + in-kernel f32 upcast / product temporaries.
        return ts * D * (2 * itemsize + 8)

    if footprint(S) <= budget_bytes:
        return S                                  # whole sequence per grid step
    best = None
    for cand in range(8, S, 8):
        if S % cand == 0 and footprint(cand) <= budget_bytes:
            best = cand
    if best is not None:
        return best
    for cand in range(8, S, 8):                    # smallest multiple-of-8 divisor
        if S % cand == 0:
            return cand
    raise ValueError(
        f"Cannot tile S={S} (D={D}, itemsize={itemsize}) within the VMEM budget "
        f"of {budget_bytes} bytes; pad S to a multiple of 8.")


@functools.partial(jax.jit, static_argnames=("seq_tile",))
def batched_softmax_attention(h, q, *, seq_tile=None):
    """h: (B, S, D) feature sequences, q: (B, D) queries -> (B, D) pooled features."""
    B, S, D = h.shape
    assert q.shape == (B, D)
    _, vmem_limit = _vmem_limits()
    if seq_tile is None:
        ts = _choose_seq_tile(S, D, jnp.dtype(h.dtype).itemsize,
                              int(vmem_limit * 0.6))
    else:
        ts = int(seq_tile)
        assert S % ts == 0 and (ts % 8 == 0 or ts == S)
    n_s = S // ts

    # q / out carried as (B, 1, D) so every block's minor-two dims are legal
    # ((1, D) == full dims) regardless of B.
    q3 = q.reshape(B, 1, D)

    out3 = pl.pallas_call(
        _attention_kernel,
        out_shape=jax.ShapeDtypeStruct((B, 1, D), h.dtype),
        grid=(B, n_s),                      # batch (parallel), S reduction last
        in_specs=[
            pl.BlockSpec((1, ts, D), lambda b, s: (b, s, 0)),
            pl.BlockSpec((1, 1, D), lambda b, s: (b, 0, 0)),
        ],
        out_specs=pl.BlockSpec((1, 1, D), lambda b, s: (b, 0, 0)),
        scratch_shapes=[
            pltpu.VMEM((1, 1), jnp.float32),     # running max
            pltpu.VMEM((1, 1), jnp.float32),     # running softmax denominator
            pltpu.VMEM((1, D), jnp.float32),     # output accumulator
        ],
        compiler_params=pltpu.CompilerParams(
            dimension_semantics=("parallel", "arbitrary"),
            vmem_limit_bytes=vmem_limit),
    )(h, q3)
    return out3.reshape(B, D)


class Features:
    """Minimal stand-in for macarico Features: just carries `dim`."""

    def __init__(self, dim):
        self.dim = dim


class Attention:
    """JAX/Pallas port of macarico Attention (arity-1 concrete instance)."""

    OVERRIDE_FORWARD = True
    arity = 1
    actor_dependent = False

    def __init__(self, features, key):
        self.features = features
        self.dim = (self.arity or 1) * self.features.dim
        # Deterministic parameter init (learned attention query), shape (1, D).
        self.query = (jax.random.normal(key, (1, self.features.dim), jnp.float32)
                      / jnp.sqrt(jnp.float32(self.features.dim)))

    def _forward(self, state):
        # state: (S, D) feature sequence.  B=1 call maps to a single grid row with
        # sublane/lane-dense (ts, D) tiles (no batched masked layout).
        out = batched_softmax_attention(state[None, :, :], self.query)
        return [out]                      # (1, D): already the required shape

    def forward(self, state):
        fts = self._forward(state)
        dim_sum = 0
        if self.arity is None:
            assert len(fts) == 1
        if self.arity is not None:
            assert len(fts) == self.arity
        for ft in fts:
            assert ft.ndim == 2
            assert ft.shape[0] == 1
            dim_sum += ft.shape[1]
        assert dim_sum == self.dim
        return fts

    def make_out_of_bounds(self):
        return jnp.zeros((1, self.features.dim), jnp.float32)


if __name__ == "__main__":
    key = jax.random.PRNGKey(0)
    k_state, k_query, k_h, k_q = jax.random.split(key, 4)

    # --- Module-semantics check (small shapes, arity-1 forward) -------------
    S, D = 8, 32
    state = jax.random.normal(k_state, (S, D), jnp.float32)
    attn = Attention(Features(dim=D), k_query)

    fts = attn.forward(state)
    out = jax.block_until_ready(fts[0])

    scores = state @ attn.query[0]
    p = jax.nn.softmax(scores)
    ref = (p[:, None] * state).sum(axis=0, keepdims=True)
    assert out.shape == (1, D)
    assert jnp.allclose(out, ref, atol=1e-3, rtol=1e-3)

    oob = jax.block_until_ready(attn.make_out_of_bounds())
    assert oob.shape == (1, D) and bool(jnp.all(oob == 0))

    # --- Batched path with a forced multi-step S reduction ------------------
    B, Sb, Db = 4, 32, 128
    hb = jax.random.normal(k_h, (B, Sb, Db), jnp.float32)
    qb = jax.random.normal(k_q, (B, Db), jnp.float32)

    # seq_tile=8 forces 4 online-softmax reduction steps along S.
    outb = jax.block_until_ready(batched_softmax_attention(hb, qb, seq_tile=8))

    def ref_one(h1, q1):
        pr = jax.nn.softmax(h1 @ q1)
        return (pr[:, None] * h1).sum(axis=0)

    refb = jax.vmap(ref_one)(hb, qb)
    assert outb.shape == (B, Db)
    assert jnp.allclose(outb, refb, atol=1e-3, rtol=1e-3)

    # Auto tile selection (whole-S block per step on any current chip).
    outb2 = jax.block_until_ready(batched_softmax_attention(hb, qb))
    assert jnp.allclose(outb2, refb, atol=1e-3, rtol=1e-3)

    print("KERNEL_OK")
</pallas_src>

<mosaic_0001>
module attributes {stable_mosaic.version = 11 : i64} {
  func.func @_attention_kernel(%arg0: i32, %arg1: i32, %arg2: memref<1x8x32xf32, #tpu.memory_space<vmem>>, %arg3: memref<1x1x32xf32, #tpu.memory_space<vmem>>, %arg4: memref<1x1x32xf32, #tpu.memory_space<vmem>>, %arg5: memref<1x1xf32, #tpu.memory_space<vmem>>, %arg6: memref<1x1xf32, #tpu.memory_space<vmem>>, %arg7: memref<1x32xf32, #tpu.memory_space<vmem>>) attributes {dimension_semantics = [#tpu.dimension_semantics<parallel>, #tpu.dimension_semantics<arbitrary>], iteration_bounds = array<i64: 1, 1>, scalar_prefetch = 0 : i64, scratch_operands = 3 : i64, tpu.core_type = #tpu.core_type<tc>, window_params = [{transform_indices = @transform_0, window_bounds = array<i64: 1, 8, 32>}, {transform_indices = @transform_1, window_bounds = array<i64: 1, 1, 32>}, {transform_indices = @transform_2, window_bounds = array<i64: 1, 1, 32>}]} {
    %c0_i32 = arith.constant 0 : i32
    %0 = arith.cmpi eq, %arg1, %c0_i32 : i32
    %1 = arith.extui %0 : i1 to i32
    %c0_i32_0 = arith.constant 0 : i32
    %2 = arith.cmpi ne, %1, %c0_i32_0 : i32
    scf.if %2 {
      %cst_28 = arith.constant 0xFF800000 : f32
      %43 = vector.broadcast %cst_28 : f32 to vector<1x1xf32>
      %c0_29 = arith.constant 0 : index
      %c0_30 = arith.constant 0 : index
      %44 = vector.load %arg5[%c0_29, %c0_30] : memref<1x1xf32, #tpu.memory_space<vmem>>, vector<1x1xf32>
      tpu.vector_store %arg5[%c0_29, %c0_30], %43 {strides = array<i32>} : memref<1x1xf32, #tpu.memory_space<vmem>>, vector<1x1xf32>,
      %cst_31 = arith.constant 0.000000e+00 : f32
      %45 = vector.broadcast %cst_31 : f32 to vector<1x1xf32>
      %c0_32 = arith.constant 0 : index
      %c0_33 = arith.constant 0 : index
      %46 = vector.load %arg6[%c0_32, %c0_33] : memref<1x1xf32, #tpu.memory_space<vmem>>, vector<1x1xf32>
      tpu.vector_store %arg6[%c0_32, %c0_33], %45 {strides = array<i32>} : memref<1x1xf32, #tpu.memory_space<vmem>>, vector<1x1xf32>,
      %cst_34 = arith.constant 0.000000e+00 : f32
      %47 = vector.broadcast %cst_34 : f32 to vector<1x32xf32>
      %c0_35 = arith.constant 0 : index
      %c0_36 = arith.constant 0 : index
      %48 = vector.load %arg7[%c0_35, %c0_36] : memref<1x32xf32, #tpu.memory_space<vmem>>, vector<1x32xf32>
      tpu.vector_store %arg7[%c0_35, %c0_36], %47 {strides = array<i32>} : memref<1x32xf32, #tpu.memory_space<vmem>>, vector<1x32xf32>,
    } else {
    }
    %c0 = arith.constant 0 : index
    %c0_1 = arith.constant 0 : index
    %c0_2 = arith.constant 0 : index
    %3 = vector.load %arg2[%c0, %c0_1, %c0_2] : memref<1x8x32xf32, #tpu.memory_space<vmem>>, vector<1x8x32xf32>
    %4 = vector.shape_cast %3 : vector<1x8x32xf32> to vector<8x32xf32>
    %c0_3 = arith.constant 0 : index
    %c0_4 = arith.constant 0 : index
    %c0_5 = arith.constant 0 : index
    %5 = vector.load %arg3[%c0_3, %c0_4, %c0_5] : memref<1x1x32xf32, #tpu.memory_space<vmem>>, vector<1x1x32xf32>
    %6 = vector.shape_cast %5 : vector<1x1x32xf32> to vector<1x32xf32>
    %7 = vector.broadcast %6 : vector<1x32xf32> to vector<8x32xf32>
    %8 = arith.mulf %4, %7 : vector<8x32xf32>
    %cst = arith.constant dense<0.000000e+00> : vector<8xf32>
    %9 = vector.multi_reduction <add>, %8, %cst [1] : vector<8x32xf32> to vector<8xf32>
    %10 = vector.shape_cast %9 : vector<8xf32> to vector<8x1xf32>
    %c0_6 = arith.constant 0 : index
    %c0_7 = arith.constant 0 : index
    %11 = vector.load %arg5[%c0_6, %c0_7] : memref<1x1xf32, #tpu.memory_space<vmem>>, vector<1x1xf32>
    %cst_8 = arith.constant dense<0xFF800000> : vector<1xf32>
    %12 = vector.multi_reduction <maximumf>, %10, %cst_8 [0] : vector<8x1xf32> to vector<1xf32>
    %13 = vector.shape_cast %12 : vector<1xf32> to vector<1x1xf32>
    %14 = arith.maximumf %11, %13 : vector<1x1xf32>
    %15 = arith.subf %11, %14 : vector<1x1xf32>
    %16 = math.exp %15 : vector<1x1xf32>
    %17 = vector.broadcast %14 : vector<1x1xf32> to vector<8x1xf32>
    %18 = arith.subf %10, %17 : vector<8x1xf32>
    %19 = math.exp %18 : vector<8x1xf32>
    %c0_9 = arith.constant 0 : index
    %c0_10 = arith.constant 0 : index
    %20 = vector.load %arg6[%c0_9, %c0_10] : memref<1x1xf32, #tpu.memory_space<vmem>>, vector<1x1xf32>
    %21 = arith.mulf %16, %20 : vector<1x1xf32>
    %cst_11 = arith.constant dense<0.000000e+00> : vector<1xf32>
    %22 = vector.multi_reduction <add>, %19, %cst_11 [0] : vector<8x1xf32> to vector<1xf32>
    %23 = vector.shape_cast %22 : vector<1xf32> to vector<1x1xf32>
    %24 = arith.addf %21, %23 : vector<1x1xf32>
    %c0_12 = arith.constant 0 : index
    %c0_13 = arith.constant 0 : index
    %25 = vector.load %arg6[%c0_12, %c0_13] : memref<1x1xf32, #tpu.memory_space<vmem>>, vector<1x1xf32>
    tpu.vector_store %arg6[%c0_12, %c0_13], %24 {strides = array<i32>} : memref<1x1xf32, #tpu.memory_space<vmem>>, vector<1x1xf32>,
    %c0_14 = arith.constant 0 : index
    %c0_15 = arith.constant 0 : index
    %26 = vector.load %arg7[%c0_14, %c0_15] : memref<1x32xf32, #tpu.memory_space<vmem>>, vector<1x32xf32>
    %27 = vector.broadcast %16 : vector<1x1xf32> to vector<1x32xf32>
    %28 = arith.mulf %27, %26 : vector<1x32xf32>
    %29 = vector.broadcast %19 : vector<8x1xf32> to vector<8x32xf32>
    %30 = arith.mulf %29, %4 : vector<8x32xf32>
    %cst_16 = arith.constant dense<0.000000e+00> : vector<32xf32>
    %31 = vector.multi_reduction <add>, %30, %cst_16 [0] : vector<8x32xf32> to vector<32xf32>
    %32 = vector.shape_cast %31 : vector<32xf32> to vector<1x32xf32>
    %33 = arith.addf %28, %32 : vector<1x32xf32>
    %c0_17 = arith.constant 0 : index
    %c0_18 = arith.constant 0 : index
    %34 = vector.load %arg7[%c0_17, %c0_18] : memref<1x32xf32, #tpu.memory_space<vmem>>, vector<1x32xf32>
    tpu.vector_store %arg7[%c0_17, %c0_18], %33 {strides = array<i32>} : memref<1x32xf32, #tpu.memory_space<vmem>>, vector<1x32xf32>,
    %c0_19 = arith.constant 0 : index
    %c0_20 = arith.constant 0 : index
    %35 = vector.load %arg5[%c0_19, %c0_20] : memref<1x1xf32, #tpu.memory_space<vmem>>, vector<1x1xf32>
    tpu.vector_store %arg5[%c0_19, %c0_20], %14 {strides = array<i32>} : memref<1x1xf32, #tpu.memory_space<vmem>>, vector<1x1xf32>,
    %c0_21 = arith.constant 0 : index
    %c0_22 = arith.constant 0 : index
    %36 = vector.load %arg7[%c0_21, %c0_22] : memref<1x32xf32, #tpu.memory_space<vmem>>, vector<1x32xf32>
    %c0_23 = arith.constant 0 : index
    %c0_24 = arith.constant 0 : index
    %37 = vector.load %arg6[%c0_23, %c0_24] : memref<1x1xf32, #tpu.memory_space<vmem>>, vector<1x1xf32>
    %38 = vector.broadcast %37 : vector<1x1xf32> to vector<1x32xf32>
    %39 = arith.divf %36, %38 : vector<1x32xf32>
    %c0_25 = arith.constant 0 : index
    %c0_26 = arith.constant 0 : index
    %c0_27 = arith.constant 0 : index
    %40 = vector.load %arg4[%c0_25, %c0_26, %c0_27] : memref<1x1x32xf32, #tpu.memory_space<vmem>>, vector<1x1x32xf32>
    %41 = vector.shape_cast %40 : vector<1x1x32xf32> to vector<1x32xf32>
    %42 = vector.shape_cast %39 : vector<1x32xf32> to vector<1x1x32xf32>
    tpu.vector_store %arg4[%c0_25, %c0_26, %c0_27], %42 {strides = array<i32>} : memref<1x1x32xf32, #tpu.memory_space<vmem>>, vector<1x1x32xf32>,
    return
  }
  func.func @transform_0(%arg0: i32, %arg1: i32) -> (i32, i32, i32) {
    %c0_i32 = arith.constant 0 : i32
    %c0_i32_0 = arith.constant 0 : i32
    return %arg0, %arg1, %c0_i32 : i32, i32, i32
  }
  func.func @transform_1(%arg0: i32, %arg1: i32) -> (i32, i32, i32) {
    %c0_i32 = arith.constant 0 : i32
    %c0_i32_0 = arith.constant 0 : i32
    %c0_i32_1 = arith.constant 0 : i32
    return %arg0, %c0_i32, %c0_i32_0 : i32, i32, i32
  }
  func.func @transform_2(%arg0: i32, %arg1: i32) -> (i32, i32, i32) {
    %c0_i32 = arith.constant 0 : i32
    %c0_i32_0 = arith.constant 0 : i32
    %c0_i32_1 = arith.constant 0 : i32
    return %arg0, %c0_i32, %c0_i32_0 : i32, i32, i32
  }
}

</mosaic_0001>

<llo_original>
// kernel: batched_softmax_attention.1
$region0: #{batched_softmax_attention.1}
  #allocation0 [shape = 'u32[]', space=smem, size = 0x4, offset = 0x4, fixed_abs, tag = 'smem constant byte address 0x4 - core index']
  #allocation1 [shape = 'u32[72,128]{1,0:T(1,128)}', space=vmem, size = 0x9000, scoped, tag = 'internal scratch']
  #allocation2 [shape = 'f32[1,1]{1,0:T(1,128)}', space=vmem, size = 0x200, scoped, tag = 'scratch operand']
  #allocation3 [shape = 'f32[1,1]{1,0:T(1,128)}', space=vmem, size = 0x200, scoped, tag = 'scratch operand']
  #allocation4 [shape = 'f32[1,32]{1,0:T(1,128)}', space=vmem, size = 0x200, scoped, tag = 'scratch operand']
  %s0 = inlined_call_operand.hbm [shape: f32[1,8,32], index: 0, kind: input, shape index: {}]
  %s1 = inlined_call_operand.vmem [shape: f32[1,1,32], index: 1, kind: input, shape index: {}]
  %s2 = inlined_call_operand.hbm [shape: f32[1,1,32], index: 2, kind: output, shape index: {}]
  %s3 = sld [smem:[#allocation0]]
  $region26: #{batched_softmax_attention.1} parent=0
    _
  %s5 = ssub.s32 1, %s3
  %s6 = scalar_select 0, %s5, %s3
  $region1: #{batched_softmax_attention.1} parent=0
    #allocation5 [shape = 'u8[4096]{0}', space=vmem, size = 0x1000, scoped, tag = 'input window, operand 0, single buffered']
    #allocation6 [shape = 's32[1]{0}', space=sflag, size = 0x4, scoped, tag = 'scoped memory for batched_softmax_attention.1']
    #allocation7 [shape = 's32[1]{0}', space=sflag, size = 0x4, scoped, tag = 'scoped memory for batched_softmax_attention.1']
    #allocation8 [shape = 'u8[512]{0}', space=vmem, size = 0x400, scoped, tag = 'output window, operand 0, single buffered']
    %7 = vsyncpa [#allocation6], 0
    %8 = vsyncpa [#allocation7], 0
    // Predicated region
    $region2: #{batched_softmax_attention.1} parent=1 // pred_check
      _
    $region3: #{batched_softmax_attention.1} parent=1 // pred_check_branch
      %10 = sbr.rel (0) target = $region5
    $region4: #{batched_softmax_attention.1} parent=1 // pred_region
      %12 = vsyncadd [#allocation6], 0
      %s14 = sshll.u32 %s0, 4
      %s15 = int_to_ptr.hbm [resolvable:$true] %s14
      %s16 = sshll.u32 [#allocation5], 4
      %s17 = int_to_ptr.vmem [resolvable:$true] %s16
      %19 = dma.hbm_to_vmem [thread:$0]  %s15, 128, %s17, [#allocation6]
    $region5: #{batched_softmax_attention.1} parent=1 // pred_fallthru
      _
    // Predicated region
    $region6: #{batched_softmax_attention.1} parent=1 // pred_check
      _
    $region7: #{batched_softmax_attention.1} parent=1 // pred_check_branch
      %21 = sbr.rel (0) target = $region9
    $region8: #{batched_softmax_attention.1} parent=1 // pred_region
      _
    $region9: #{batched_softmax_attention.1} parent=1 // pred_fallthru
      _
    // Predicated region
    $region10: #{batched_softmax_attention.1} parent=1 // pred_check
      _
    $region11: #{batched_softmax_attention.1} parent=1 // pred_check_branch
      %23 = sbr.rel (0) target = $region13
    $region12: #{batched_softmax_attention.1} parent=1 // pred_region
      %25 = dma.done [#allocation6], 128
    $region13: #{batched_softmax_attention.1} parent=1 // pred_fallthru
      _
    %p26 = scmp.eq.s32.totalorder 0, 0
    // Predicated region
    $region14: #{batched_softmax_attention.1} parent=1 // pred_check
      %p27 = pneg %p26
    $region15: #{batched_softmax_attention.1} parent=1 // pred_check_branch
      %29 = sbr.rel (%p27) target = $region17
    $region16: #{batched_softmax_attention.1} parent=1 // pred_region
      %vm30 = vcmask 0
      %31 = vst.msk [vmem:[#allocation2] sm:$0x1] %vm30, -inf
      %32 = vst.msk [vmem:[#allocation3] sm:$0x1] %vm30, 0.0
      %vm33 = vcmask 253952
      %34 = vst.msk [vmem:[#allocation4] sm:$0x1] %vm33, 0.0
    $region17: #{batched_softmax_attention.1} parent=1 // pred_fallthru
      _
    %v35 = vld [vmem:[#allocation5] sm:$0xff]
    %v36 = vld [vmem:[%s1] sm:$0x1]
    %v38 = vperm.slane %v36, 0
    %v40 = vmul.f32 %v35, %v38
    %vm41 = vcmask 261120
    %v42 = vsel %vm41, %v40, 0.0
    %43 = vadd.xlane.f32.xlu0 %v42
    %v44 = vpop.xlane.xlu0 %43
    %v45 = vld [vmem:[#allocation2] sm:$0x1]
    %v46 = vrot.slane %v44, 4
    %v47 = vmax.f32 %v44, %v46
    %v48 = vrot.slane %v47, 2
    %v49 = vmax.f32 %v47, %v48
    %v50 = vrot.slane %v49, 1
    %v51 = vmax.f32 %v49, %v50
    %v52 = vmax.f32 %v45, %v51
    %v53 = vsub.f32 %v45, %v52
    %v54 = vmul.f32 %v53, 1.442695
    %v55 = vpow.pop %v54
    %v57 = vperm.slane %v52, 0
    %v59 = vsub.f32 %v44, %v57
    %v60 = vmul.f32 %v59, 1.442695
    %v61 = vpow.pop %v60
    %v62 = vld [vmem:[#allocation3] sm:$0x1]
    %v63 = vmul.f32 %v55, %v62
    %vm64 = vcmask 7168
    %v65 = vsel %vm64, %v61, 0.0
    %v66 = vrot.slane %v65, 4
    %v67 = vadd.f32 %v65, %v66
    %v68 = vrot.slane %v67, 2
    %v69 = vadd.f32 %v67, %v68
    %v70 = vrot.slane %v69, 1
    %v71 = vadd.f32 %v69, %v70
    %v72 = vadd.f32 %v63, %v71
    %vm73 = vcmask 0
    %74 = vst.msk [vmem:[#allocation3] sm:$0x1] %vm73, %v72
    %v75 = vld [vmem:[#allocation4] sm:$0x1]
    %77 = vset.pattern.permute.xlu0 0
    %78 = vperm.xlu0 %77, %v55
    %v79 = vpop.permute.xlu0 %78
    %v81 = vperm.slane %v79, 0
    %v82 = vmul.f32 %v81, %v75
    %84 = vset.pattern.permute.xlu0 0
    %85 = vperm.xlu0 %84, %v61
    %v86 = vpop.permute.xlu0 %85
    %v88 = vmul.f32 %v86, %v35
    %v89 = vsel %vm41, %v88, 0.0
    %v90 = vrot.slane %v89, 4
    %v91 = vadd.f32 %v89, %v90
    %v92 = vrot.slane %v91, 2
    %v93 = vadd.f32 %v91, %v92
    %v94 = vrot.slane %v93, 1
    %v95 = vadd.f32 %v93, %v94
    %v96 = vadd.f32 %v82, %v95
    %vm97 = vcmask 253952
    %98 = vst.msk [vmem:[#allocation4] sm:$0x1] %vm97, %v96
    %99 = vst.msk [vmem:[#allocation2] sm:$0x1] %vm73, %v52
    %v100 = vld [vmem:[#allocation4] sm:$0x1]
    %v101 = vld [vmem:[#allocation3] sm:$0x1]
    %103 = vset.pattern.permute.xlu0 0
    %104 = vperm.xlu0 %103, %v101
    %v105 = vpop.permute.xlu0 %104
    %v107 = vperm.slane %v105, 0
    %v108 = vrcp.pop %v107
    %v109 = vmul.f32 %v107, %v108
    %v110 = vsub.f32 1.0, %v109
    %v111 = vmul.f32 %v108, %v110
    %v112 = vadd.f32 %v108, %v111
    %vm113 = vweird.f32 %v107
    %vm114 = vweird.f32 %v108
    %vm115 = vmor %vm113, %vm114
    %v116 = vsel %vm115, %v108, %v112
    %v117 = vand.u32 2147483647, %v107
    %vm118 = vcmp.eq.f32.partialorder %v117, 8.507059e+37
    %v119 = vand.u32 %v107, 2147483648
    %v120 = vor.u32 1.1754944e-38, %v119
    %v121 = vsel %vm118, %v120, %v116
    %v122 = vmul.f32 %v100, %v121
    %123 = vst.msk [vmem:[#allocation8] sm:$0x1] %vm97, %v122
    // Predicated region
    $region18: #{batched_softmax_attention.1} parent=1 // pred_check
      _
    $region19: #{batched_softmax_attention.1} parent=1 // pred_check_branch
      %125 = sbr.rel (0) target = $region21
    $region20: #{batched_softmax_attention.1} parent=1 // pred_region
      %127 = vsyncadd [#allocation7], 0
      %s129 = sshll.u32 [#allocation8], 4
      %s130 = int_to_ptr.vmem [resolvable:$true] %s129
      %s131 = sshll.u32 %s2, 4
      %s132 = int_to_ptr.hbm [resolvable:$true] %s131
      %134 = dma.vmem_to_hbm [thread:$0]  %s130, 16, %s132, [#allocation7]
    $region21: #{batched_softmax_attention.1} parent=1 // pred_fallthru
      _
    // Predicated region
    $region22: #{batched_softmax_attention.1} parent=1 // pred_check
      _
    $region23: #{batched_softmax_attention.1} parent=1 // pred_check_branch
      %136 = sbr.rel (0) target = $region25
    $region24: #{batched_softmax_attention.1} parent=1 // pred_region
      %138 = dma.done [#allocation7], 16
    $region25: #{batched_softmax_attention.1} parent=1 // pred_fallthru
      _
    %139 = vsyncpa [#allocation6], 1
    %140 = vsyncpa [#allocation7], 1

</llo_original>
